<compile_context>
chip_gen: v7x
topology: tpu7x:2x2x1
jax: 0.10.0
libtpu: 0.0.40
codegen_flags: <defaults>
</compile_context>

<pallas_src>
import functools

import jax
import jax.numpy as jnp
from jax.experimental import pallas as pl
from jax.experimental.pallas import tpu as pltpu

BN_EPS = 1e-5
MATMUL_DTYPE = jnp.bfloat16   # MXU operand dtype; accumulation & epilogue stay f32.


def _conv3x3(pad_ref, slab_ref, w_ref, bias, left_edge, right_edge, W, HW,
             apply_relu, interior_start, use_slab):
    """3x3 conv (pad=1, stride=1) on a zero-padded, spatially flattened activation.

    pad_ref : (Cin, L) VMEM scratch; image lives at lanes
              [interior_start, interior_start + HW), zeros elsewhere (halo).
    slab_ref: (9*Cin, HW) VMEM im2col scratch (only when use_slab).
    w_ref   : (Cout, 9*Cin) if use_slab else (9, Cout, Cin); BN scale pre-folded.
    Returns (Cout, HW) f32 = relu?(conv + bias).
    """
    cin = pad_ref.shape[0]
    base = interior_start - W - 1            # lane offset of (row=-1, col=-1)

    def tap_slice(ky, kx):
        start = base + ky * W + kx
        sl = pad_ref[:, start:start + HW]                # (Cin, HW), static slice
        if kx == 0:                                      # col -1 -> zero (wrap mask)
            sl = jnp.where(left_edge, jnp.zeros_like(sl), sl)
        elif kx == 2:                                    # col W  -> zero (wrap mask)
            sl = jnp.where(right_edge, jnp.zeros_like(sl), sl)
        return sl

    if use_slab:
        # Assemble the im2col slab once (in the matmul dtype) and do one big-K matmul.
        for ky in range(3):
            for kx in range(3):
                tap = 3 * ky + kx
                slab_ref[tap * cin:(tap + 1) * cin, :] = tap_slice(ky, kx)
        y = jnp.dot(w_ref[...], slab_ref[...], preferred_element_type=jnp.float32)
    else:
        # Nine accumulating matmuls reading the padded activation directly (no slab stores).
        cout = w_ref.shape[1]
        y = jnp.zeros((cout, HW), jnp.float32)
        for ky in range(3):
            for kx in range(3):
                tap = 3 * ky + kx
                y = y + jnp.dot(w_ref[tap], tap_slice(ky, kx),
                                preferred_element_type=jnp.float32)

    y = y + bias                                          # (Cout, 1) lane-broadcast
    if apply_relu:
        y = jnp.maximum(y, 0.0)
    return y


def _basic_block_kernel(x_ref, w1_ref, b1_ref, w2_ref, b2_ref, out_ref,
                        pad_ref, *slab, H, W, interior_start, use_slab):
    slab_ref = slab[0] if use_slab else None
    HW = H * W
    C = pad_ref.shape[0]

    # Edge masks hoisted: computed once, reused by both convs.
    col = jax.lax.broadcasted_iota(jnp.int32, (1, HW), 1) % W
    left_edge = col == 0
    right_edge = col == W - 1

    # Zero only the halo lanes; the interior is fully overwritten below.
    pad_ref[:, :interior_start] = jnp.zeros((C, interior_start), pad_ref.dtype)
    tail = pad_ref.shape[1] - (interior_start + HW)
    pad_ref[:, interior_start + HW:] = jnp.zeros((C, tail), pad_ref.dtype)

    # conv1 + bn1 + relu  (intermediate never leaves VMEM).
    pad_ref[:, interior_start:interior_start + HW] = x_ref[0].astype(pad_ref.dtype)
    y1 = _conv3x3(pad_ref, slab_ref, w1_ref, b1_ref[...], left_edge, right_edge,
                  W, HW, apply_relu=True, interior_start=interior_start,
                  use_slab=use_slab)

    # conv2 + bn2  (halo lanes are still zero).
    pad_ref[:, interior_start:interior_start + HW] = y1.astype(pad_ref.dtype)
    y2 = _conv3x3(pad_ref, slab_ref, w2_ref, b2_ref[...], left_edge, right_edge,
                  W, HW, apply_relu=False, interior_start=interior_start,
                  use_slab=use_slab)

    # Residual add (re-read the still-resident input block) + relu.
    out_ref[0] = jnp.maximum(y2 + x_ref[0], 0.0).astype(out_ref.dtype)


def _fold_bn(bn):
    scale = bn["gamma"] * jax.lax.rsqrt(bn["var"] + BN_EPS)       # (C,)
    bias = bn["beta"] - bn["mean"] * scale                        # (C,)
    return scale, bias.reshape(-1, 1)                             # bias (C,1) lane-broadcast


def _pack_weight(w, scale, mm_dtype, use_slab):
    """(3,3,Cin,Cout) HWIO -> packed weight with BN scale folded (f32) then cast."""
    kh, kw, cin, cout = w.shape
    wt = jnp.transpose(w, (3, 0, 1, 2)) * scale.reshape(cout, 1, 1, 1)  # (Cout,3,3,Cin) f32
    if use_slab:
        return wt.reshape(cout, kh * kw * cin).astype(mm_dtype)         # (Cout, 9*Cin)
    return jnp.transpose(wt, (1, 2, 0, 3)).reshape(kh * kw, cout, cin).astype(mm_dtype)


@functools.partial(jax.jit, static_argnames=("use_slab",))
def basic_block_forward(x_nchw, params, use_slab=None):
    """x_nchw: (N, C, H, W) f32 -> (N, C, H, W) f32 (BasicBlock, identity residual)."""
    N, C, H, W = x_nchw.shape
    assert params["w1"].shape == (3, 3, C, C) and params["w2"].shape == (3, 3, C, C), (
        "identity-residual BasicBlock requires inplanes == planes, stride=1")
    HW = H * W

    if use_slab is None:
        # Big-K slab matmul when Cin is small (fills the MXU K dim); per-tap
        # accumulating matmuls when Cin is large (kills the slab store traffic).
        use_slab = C < 128
    # bf16 scratch needs C % 16 == 0 for clean sublane packing (true for real ResNet
    # stages); otherwise fall back to f32 scratch/weights.
    mm_dtype = MATMUL_DTYPE if C % 16 == 0 else jnp.float32

    # Zero-halo layout: [0, interior_start) front pad (covers row -1 and keeps the
    # interior store 128-lane aligned), then the image, then bottom-row pad + 1.
    interior_start = ((W + 1 + 127) // 128) * 128
    pad_len = interior_start + HW + W + 1

    x_flat = x_nchw.reshape(N, C, HW)                     # metadata-only reshape
    s1, b1 = _fold_bn(params["bn1"])
    s2, b2 = _fold_bn(params["bn2"])
    w1 = _pack_weight(params["w1"], s1, mm_dtype, use_slab)
    w2 = _pack_weight(params["w2"], s2, mm_dtype, use_slab)

    kernel = functools.partial(_basic_block_kernel, H=H, W=W,
                               interior_start=interior_start, use_slab=use_slab)

    act_spec = pl.BlockSpec((1, C, HW), lambda n: (n, 0, 0))   # HW on lanes (dense)
    if use_slab:
        w_spec = pl.BlockSpec((C, 9 * C), lambda n: (0, 0))
    else:
        w_spec = pl.BlockSpec((9, C, C), lambda n: (0, 0, 0))
    b_spec = pl.BlockSpec((C, 1), lambda n: (0, 0))

    scratch_shapes = [pltpu.VMEM((C, pad_len), mm_dtype)]      # zero-padded activation
    if use_slab:
        scratch_shapes.append(pltpu.VMEM((9 * C, HW), mm_dtype))   # im2col slab (shared by both convs)

    out = pl.pallas_call(
        kernel,
        out_shape=jax.ShapeDtypeStruct((N, C, HW), jnp.float32),
        grid_spec=pltpu.PrefetchScalarGridSpec(
            num_scalar_prefetch=0,
            grid=(N,),                                     # one image per grid step
            in_specs=[act_spec, w_spec, b_spec, w_spec, b_spec],
            out_specs=act_spec,
            scratch_shapes=scratch_shapes,
        ),
        compiler_params=pltpu.CompilerParams(
            dimension_semantics=("parallel",),             # megacore: split over batch
            vmem_limit_bytes=32 * 1024 * 1024),
    )(x_flat, w1, b1, w2, b2)
    return out.reshape(N, C, H, W)


def init_basic_block_params(key, inplanes, planes):
    ks = jax.random.split(key, 10)
    p = {"w1": 0.1 * jax.random.normal(ks[0], (3, 3, inplanes, planes), jnp.float32),
         "w2": 0.1 * jax.random.normal(ks[1], (3, 3, planes, planes), jnp.float32)}
    for i, name in enumerate(["bn1", "bn2"]):
        base = 2 + 4 * i
        p[name] = {
            "gamma": 1.0 + 0.1 * jax.random.normal(ks[base + 0], (planes,), jnp.float32),
            "beta": 0.1 * jax.random.normal(ks[base + 1], (planes,), jnp.float32),
            "mean": 0.1 * jax.random.normal(ks[base + 2], (planes,), jnp.float32),
            "var": jnp.abs(jax.random.normal(ks[base + 3], (planes,), jnp.float32)) + 0.5,
        }
    return p


def _reference_forward(x_nchw, params, compute_dtype):
    """Plain-JAX reference (lax conv, NCHW).  Conv operands are rounded to the
    kernel's matmul dtype to mirror MXU precision; accumulation stays f32."""
    dn = jax.lax.conv_dimension_numbers(x_nchw.shape, params["w1"].shape,
                                        ("NCHW", "HWIO", "NCHW"))

    def conv(a, w):
        a = a.astype(compute_dtype).astype(jnp.float32)
        w = w.astype(compute_dtype).astype(jnp.float32)
        return jax.lax.conv_general_dilated(
            a, w, (1, 1), ((1, 1), (1, 1)), dimension_numbers=dn,
            precision=jax.lax.Precision.HIGHEST)

    def bnp(bn):
        s, b = _fold_bn(bn)
        return s.reshape(-1, 1, 1), b.reshape(-1, 1, 1)

    s1, b1 = bnp(params["bn1"])
    s2, b2 = bnp(params["bn2"])
    out = jnp.maximum(conv(x_nchw, params["w1"]) * s1 + b1, 0.0)
    out = jnp.maximum(conv(out, params["w2"]) * s2 + b2 + x_nchw, 0.0)
    return out


if __name__ == "__main__":
    key = jax.random.PRNGKey(0)

    cases = [
        ((2, 16, 16, 16), None,  "bf16 slab (single big-K matmul)"),
        ((2, 16, 16, 16), False, "bf16 per-tap accumulating matmuls"),
        ((2, 4, 16, 16),  None,  "f32 fallback (C % 16 != 0)"),
    ]
    for i, (shape, use_slab, label) in enumerate(cases):
        kx, kp = jax.random.split(jax.random.fold_in(key, i))
        N, C, H, W = shape
        x = jax.random.normal(kx, shape, jnp.float32)
        params = init_basic_block_params(kp, inplanes=C, planes=C)

        out = jax.block_until_ready(basic_block_forward(x, params, use_slab=use_slab))

        mm_dtype = MATMUL_DTYPE if C % 16 == 0 else jnp.float32
        ref = _reference_forward(x, params, mm_dtype)

        assert out.shape == shape and out.dtype == jnp.float32
        max_err = float(jnp.max(jnp.abs(out - ref)))
        assert jnp.allclose(out, ref, atol=2e-2, rtol=2e-2), (
            f"{label}: max abs err = {max_err}")
    print("KERNEL_OK")
</pallas_src>

<mosaic_0001>
module attributes {stable_mosaic.version = 11 : i64} {
  func.func @_basic_block_kernel(%arg0: i32, %arg1: memref<1x16x256xf32, #tpu.memory_space<vmem>>, %arg2: memref<16x144xbf16, #tpu.memory_space<vmem>>, %arg3: memref<16x1xf32, #tpu.memory_space<vmem>>, %arg4: memref<16x144xbf16, #tpu.memory_space<vmem>>, %arg5: memref<16x1xf32, #tpu.memory_space<vmem>>, %arg6: memref<1x16x256xf32, #tpu.memory_space<vmem>>, %arg7: memref<16x401xbf16, #tpu.memory_space<vmem>>, %arg8: memref<144x256xbf16, #tpu.memory_space<vmem>>) attributes {dimension_semantics = [#tpu.dimension_semantics<parallel>], iteration_bounds = array<i64: 2>, scalar_prefetch = 0 : i64, scratch_operands = 2 : i64, tpu.core_type = #tpu.core_type<tc>, window_params = [{transform_indices = @transform_0, window_bounds = array<i64: 1, 16, 256>}, {pipeline_mode = #tpu.pipeline_mode<synchronous>, transform_indices = @transform_1, window_bounds = array<i64: 16, 144>}, {pipeline_mode = #tpu.pipeline_mode<synchronous>, transform_indices = @transform_2, window_bounds = array<i64: 16, 1>}, {pipeline_mode = #tpu.pipeline_mode<synchronous>, transform_indices = @transform_3, window_bounds = array<i64: 16, 144>}, {pipeline_mode = #tpu.pipeline_mode<synchronous>, transform_indices = @transform_4, window_bounds = array<i64: 16, 1>}, {transform_indices = @transform_5, window_bounds = array<i64: 1, 16, 256>}]} {
    %0 = tpu.iota {dimensions = array<i32: 1>} : vector<1x256xi32>
    %c16_i32 = arith.constant 16 : i32
    %c0_i32 = arith.constant 0 : i32
    %1 = arith.cmpi eq, %c16_i32, %c0_i32 : i32
    %c1_i32 = arith.constant 1 : i32
    %2 = arith.select %1, %c1_i32, %c16_i32 : i32
    %3 = vector.broadcast %2 : i32 to vector<1x256xi32>
    %4 = arith.remsi %0, %3 : vector<1x256xi32>
    %c0_i32_0 = arith.constant 0 : i32
    %5 = vector.broadcast %c0_i32_0 : i32 to vector<1x256xi32>
    %6 = arith.cmpi ne, %4, %5 : vector<1x256xi32>
    %c0_i32_1 = arith.constant 0 : i32
    %7 = vector.broadcast %c0_i32_1 : i32 to vector<1x256xi32>
    %8 = arith.cmpi slt, %4, %7 : vector<1x256xi32>
    %c0_i32_2 = arith.constant 0 : i32
    %9 = arith.cmpi slt, %2, %c0_i32_2 : i32
    %10 = vector.broadcast %9 : i1 to vector<1x256xi1>
    %11 = vector.broadcast %10 : vector<1x256xi1> to vector<1x256xi1>
    %12 = arith.xori %8, %11 : vector<1x256xi1>
    %13 = arith.andi %12, %6 : vector<1x256xi1>
    %14 = vector.broadcast %2 : i32 to vector<1x256xi32>
    %15 = arith.addi %4, %14 : vector<1x256xi32>
    %16 = arith.select %13, %15, %4 : vector<1x256xi1>, vector<1x256xi32>
    %c0_i32_3 = arith.constant 0 : i32
    %17 = vector.broadcast %c0_i32_3 : i32 to vector<1x256xi32>
    %18 = arith.cmpi eq, %16, %17 : vector<1x256xi32>
    %c15_i32 = arith.constant 15 : i32
    %19 = vector.broadcast %c15_i32 : i32 to vector<1x256xi32>
    %20 = arith.cmpi eq, %16, %19 : vector<1x256xi32>
    %cst = arith.constant 0.000000e+00 : bf16
    %21 = vector.broadcast %cst : bf16 to vector<16x128xbf16>
    %c0 = arith.constant 0 : index
    %c0_4 = arith.constant 0 : index
    %22 = vector.load %arg7[%c0, %c0_4] : memref<16x401xbf16, #tpu.memory_space<vmem>>, vector<16x128xbf16>
    tpu.vector_store %arg7[%c0, %c0_4], %21 {strides = array<i32>} : memref<16x401xbf16, #tpu.memory_space<vmem>>, vector<16x128xbf16>,
    %cst_5 = arith.constant 0.000000e+00 : bf16
    %23 = vector.broadcast %cst_5 : bf16 to vector<16x17xbf16>
    %c0_6 = arith.constant 0 : index
    %c384 = arith.constant 384 : index
    %24 = vector.load %arg7[%c0_6, %c384] : memref<16x401xbf16, #tpu.memory_space<vmem>>, vector<16x17xbf16>
    tpu.vector_store %arg7[%c0_6, %c384], %23 {strides = array<i32>} : memref<16x401xbf16, #tpu.memory_space<vmem>>, vector<16x17xbf16>,
    %c0_7 = arith.constant 0 : index
    %c0_8 = arith.constant 0 : index
    %c0_9 = arith.constant 0 : index
    %25 = vector.load %arg1[%c0_7, %c0_8, %c0_9] : memref<1x16x256xf32, #tpu.memory_space<vmem>>, vector<1x16x256xf32>
    %26 = vector.shape_cast %25 : vector<1x16x256xf32> to vector<16x256xf32>
    %27 = arith.truncf %26 : vector<16x256xf32> to vector<16x256xbf16>
    %c0_10 = arith.constant 0 : index
    %c128 = arith.constant 128 : index
    %28 = vector.load %arg7[%c0_10, %c128] : memref<16x401xbf16, #tpu.memory_space<vmem>>, vector<16x256xbf16>
    tpu.vector_store %arg7[%c0_10, %c128], %27 {strides = array<i32>} : memref<16x401xbf16, #tpu.memory_space<vmem>>, vector<16x256xbf16>,
    %c0_11 = arith.constant 0 : index
    %c0_12 = arith.constant 0 : index
    %29 = vector.load %arg3[%c0_11, %c0_12] : memref<16x1xf32, #tpu.memory_space<vmem>>, vector<16x1xf32>
    %c0_13 = arith.constant 0 : index
    %c111 = arith.constant 111 : index
    %30 = vector.load %arg7[%c0_13, %c111] : memref<16x401xbf16, #tpu.memory_space<vmem>>, vector<16x256xbf16>
    %cst_14 = arith.constant 0.000000e+00 : bf16
    %31 = vector.broadcast %cst_14 : bf16 to vector<16x256xbf16>
    %32 = vector.shape_cast %18 : vector<1x256xi1> to vector<1x256xi1>
    %33 = vector.broadcast %32 : vector<1x256xi1> to vector<16x256xi1>
    %34 = arith.select %33, %31, %30 : vector<16x256xi1>, vector<16x256xbf16>
    %c0_15 = arith.constant 0 : index
    %c0_16 = arith.constant 0 : index
    %35 = vector.load %arg8[%c0_15, %c0_16] : memref<144x256xbf16, #tpu.memory_space<vmem>>, vector<16x256xbf16>
    tpu.vector_store %arg8[%c0_15, %c0_16], %34 {strides = array<i32>} : memref<144x256xbf16, #tpu.memory_space<vmem>>, vector<16x256xbf16>,
    %c0_17 = arith.constant 0 : index
    %c112 = arith.constant 112 : index
    %36 = vector.load %arg7[%c0_17, %c112] : memref<16x401xbf16, #tpu.memory_space<vmem>>, vector<16x256xbf16>
    %c16 = arith.constant 16 : index
    %c0_18 = arith.constant 0 : index
    %37 = vector.load %arg8[%c16, %c0_18] : memref<144x256xbf16, #tpu.memory_space<vmem>>, vector<16x256xbf16>
    tpu.vector_store %arg8[%c16, %c0_18], %36 {strides = array<i32>} : memref<144x256xbf16, #tpu.memory_space<vmem>>, vector<16x256xbf16>,
    %c0_19 = arith.constant 0 : index
    %c113 = arith.constant 113 : index
    %38 = vector.load %arg7[%c0_19, %c113] : memref<16x401xbf16, #tpu.memory_space<vmem>>, vector<16x256xbf16>
    %cst_20 = arith.constant 0.000000e+00 : bf16
    %39 = vector.broadcast %cst_20 : bf16 to vector<16x256xbf16>
    %40 = vector.shape_cast %20 : vector<1x256xi1> to vector<1x256xi1>
    %41 = vector.broadcast %40 : vector<1x256xi1> to vector<16x256xi1>
    %42 = arith.select %41, %39, %38 : vector<16x256xi1>, vector<16x256xbf16>
    %c32 = arith.constant 32 : index
    %c0_21 = arith.constant 0 : index
    %43 = vector.load %arg8[%c32, %c0_21] : memref<144x256xbf16, #tpu.memory_space<vmem>>, vector<16x256xbf16>
    tpu.vector_store %arg8[%c32, %c0_21], %42 {strides = array<i32>} : memref<144x256xbf16, #tpu.memory_space<vmem>>, vector<16x256xbf16>,
    %c0_22 = arith.constant 0 : index
    %c127 = arith.constant 127 : index
    %44 = vector.load %arg7[%c0_22, %c127] : memref<16x401xbf16, #tpu.memory_space<vmem>>, vector<16x256xbf16>
    %cst_23 = arith.constant 0.000000e+00 : bf16
    %45 = vector.broadcast %cst_23 : bf16 to vector<16x256xbf16>
    %46 = vector.shape_cast %18 : vector<1x256xi1> to vector<1x256xi1>
    %47 = vector.broadcast %46 : vector<1x256xi1> to vector<16x256xi1>
    %48 = arith.select %47, %45, %44 : vector<16x256xi1>, vector<16x256xbf16>
    %c48 = arith.constant 48 : index
    %c0_24 = arith.constant 0 : index
    %49 = vector.load %arg8[%c48, %c0_24] : memref<144x256xbf16, #tpu.memory_space<vmem>>, vector<16x256xbf16>
    tpu.vector_store %arg8[%c48, %c0_24], %48 {strides = array<i32>} : memref<144x256xbf16, #tpu.memory_space<vmem>>, vector<16x256xbf16>,
    %c0_25 = arith.constant 0 : index
    %c128_26 = arith.constant 128 : index
    %50 = vector.load %arg7[%c0_25, %c128_26] : memref<16x401xbf16, #tpu.memory_space<vmem>>, vector<16x256xbf16>
    %c64 = arith.constant 64 : index
    %c0_27 = arith.constant 0 : index
    %51 = vector.load %arg8[%c64, %c0_27] : memref<144x256xbf16, #tpu.memory_space<vmem>>, vector<16x256xbf16>
    tpu.vector_store %arg8[%c64, %c0_27], %50 {strides = array<i32>} : memref<144x256xbf16, #tpu.memory_space<vmem>>, vector<16x256xbf16>,
    %c0_28 = arith.constant 0 : index
    %c129 = arith.constant 129 : index
    %52 = vector.load %arg7[%c0_28, %c129] : memref<16x401xbf16, #tpu.memory_space<vmem>>, vector<16x256xbf16>
    %cst_29 = arith.constant 0.000000e+00 : bf16
    %53 = vector.broadcast %cst_29 : bf16 to vector<16x256xbf16>
    %54 = vector.shape_cast %20 : vector<1x256xi1> to vector<1x256xi1>
    %55 = vector.broadcast %54 : vector<1x256xi1> to vector<16x256xi1>
    %56 = arith.select %55, %53, %52 : vector<16x256xi1>, vector<16x256xbf16>
    %c80 = arith.constant 80 : index
    %c0_30 = arith.constant 0 : index
    %57 = vector.load %arg8[%c80, %c0_30] : memref<144x256xbf16, #tpu.memory_space<vmem>>, vector<16x256xbf16>
    tpu.vector_store %arg8[%c80, %c0_30], %56 {strides = array<i32>} : memref<144x256xbf16, #tpu.memory_space<vmem>>, vector<16x256xbf16>,
    %c0_31 = arith.constant 0 : index
    %c143 = arith.constant 143 : index
    %58 = vector.load %arg7[%c0_31, %c143] : memref<16x401xbf16, #tpu.memory_space<vmem>>, vector<16x256xbf16>
    %cst_32 = arith.constant 0.000000e+00 : bf16
    %59 = vector.broadcast %cst_32 : bf16 to vector<16x256xbf16>
    %60 = vector.shape_cast %18 : vector<1x256xi1> to vector<1x256xi1>
    %61 = vector.broadcast %60 : vector<1x256xi1> to vector<16x256xi1>
    %62 = arith.select %61, %59, %58 : vector<16x256xi1>, vector<16x256xbf16>
    %c96 = arith.constant 96 : index
    %c0_33 = arith.constant 0 : index
    %63 = vector.load %arg8[%c96, %c0_33] : memref<144x256xbf16, #tpu.memory_space<vmem>>, vector<16x256xbf16>
    tpu.vector_store %arg8[%c96, %c0_33], %62 {strides = array<i32>} : memref<144x256xbf16, #tpu.memory_space<vmem>>, vector<16x256xbf16>,
    %c0_34 = arith.constant 0 : index
    %c144 = arith.constant 144 : index
    %64 = vector.load %arg7[%c0_34, %c144] : memref<16x401xbf16, #tpu.memory_space<vmem>>, vector<16x256xbf16>
    %c112_35 = arith.constant 112 : index
    %c0_36 = arith.constant 0 : index
    %65 = vector.load %arg8[%c112_35, %c0_36] : memref<144x256xbf16, #tpu.memory_space<vmem>>, vector<16x256xbf16>
    tpu.vector_store %arg8[%c112_35, %c0_36], %64 {strides = array<i32>} : memref<144x256xbf16, #tpu.memory_space<vmem>>, vector<16x256xbf16>,
    %c0_37 = arith.constant 0 : index
    %c145 = arith.constant 145 : index
    %66 = vector.load %arg7[%c0_37, %c145] : memref<16x401xbf16, #tpu.memory_space<vmem>>, vector<16x256xbf16>
    %cst_38 = arith.constant 0.000000e+00 : bf16
    %67 = vector.broadcast %cst_38 : bf16 to vector<16x256xbf16>
    %68 = vector.shape_cast %20 : vector<1x256xi1> to vector<1x256xi1>
    %69 = vector.broadcast %68 : vector<1x256xi1> to vector<16x256xi1>
    %70 = arith.select %69, %67, %66 : vector<16x256xi1>, vector<16x256xbf16>
    %c128_39 = arith.constant 128 : index
    %c0_40 = arith.constant 0 : index
    %71 = vector.load %arg8[%c128_39, %c0_40] : memref<144x256xbf16, #tpu.memory_space<vmem>>, vector<16x256xbf16>
    tpu.vector_store %arg8[%c128_39, %c0_40], %70 {strides = array<i32>} : memref<144x256xbf16, #tpu.memory_space<vmem>>, vector<16x256xbf16>,
    %c0_41 = arith.constant 0 : index
    %c0_42 = arith.constant 0 : index
    %72 = vector.load %arg2[%c0_41, %c0_42] : memref<16x144xbf16, #tpu.memory_space<vmem>>, vector<16x144xbf16>
    %c0_43 = arith.constant 0 : index
    %c0_44 = arith.constant 0 : index
    %73 = vector.load %arg8[%c0_43, %c0_44] : memref<144x256xbf16, #tpu.memory_space<vmem>>, vector<144x256xbf16>
    %cst_45 = arith.constant dense<0.000000e+00> : vector<16x256xf32>
    %74 = tpu.matmul %72, %73, %cst_45 {dimension_numbers = #tpu.dot_dimension_numbers<[1], [0], [0], [1], [0, 0, 1, 1], [], []>} : vector<16x144xbf16>, vector<144x256xbf16>, vector<16x256xf32> -> vector<16x256xf32>
    %75 = vector.broadcast %29 : vector<16x1xf32> to vector<16x256xf32>
    %76 = arith.addf %74, %75 : vector<16x256xf32>
    %cst_46 = arith.constant 0.000000e+00 : f32
    %77 = vector.broadcast %cst_46 : f32 to vector<16x256xf32>
    %78 = arith.maximumf %76, %77 : vector<16x256xf32>
    %79 = arith.truncf %78 : vector<16x256xf32> to vector<16x256xbf16>
    %c0_47 = arith.constant 0 : index
    %c128_48 = arith.constant 128 : index
    %80 = vector.load %arg7[%c0_47, %c128_48] : memref<16x401xbf16, #tpu.memory_space<vmem>>, vector<16x256xbf16>
    tpu.vector_store %arg7[%c0_47, %c128_48], %79 {strides = array<i32>} : memref<16x401xbf16, #tpu.memory_space<vmem>>, vector<16x256xbf16>,
    %c0_49 = arith.constant 0 : index
    %c0_50 = arith.constant 0 : index
    %81 = vector.load %arg5[%c0_49, %c0_50] : memref<16x1xf32, #tpu.memory_space<vmem>>, vector<16x1xf32>
    %c0_51 = arith.constant 0 : index
    %c111_52 = arith.constant 111 : index
    %82 = vector.load %arg7[%c0_51, %c111_52] : memref<16x401xbf16, #tpu.memory_space<vmem>>, vector<16x256xbf16>
    %cst_53 = arith.constant 0.000000e+00 : bf16
    %83 = vector.broadcast %cst_53 : bf16 to vector<16x256xbf16>
    %84 = vector.shape_cast %18 : vector<1x256xi1> to vector<1x256xi1>
    %85 = vector.broadcast %84 : vector<1x256xi1> to vector<16x256xi1>
    %86 = arith.select %85, %83, %82 : vector<16x256xi1>, vector<16x256xbf16>
    %c0_54 = arith.constant 0 : index
    %c0_55 = arith.constant 0 : index
    %87 = vector.load %arg8[%c0_54, %c0_55] : memref<144x256xbf16, #tpu.memory_space<vmem>>, vector<16x256xbf16>
    tpu.vector_store %arg8[%c0_54, %c0_55], %86 {strides = array<i32>} : memref<144x256xbf16, #tpu.memory_space<vmem>>, vector<16x256xbf16>,
    %c0_56 = arith.constant 0 : index
    %c112_57 = arith.constant 112 : index
    %88 = vector.load %arg7[%c0_56, %c112_57] : memref<16x401xbf16, #tpu.memory_space<vmem>>, vector<16x256xbf16>
    %c16_58 = arith.constant 16 : index
    %c0_59 = arith.constant 0 : index
    %89 = vector.load %arg8[%c16_58, %c0_59] : memref<144x256xbf16, #tpu.memory_space<vmem>>, vector<16x256xbf16>
    tpu.vector_store %arg8[%c16_58, %c0_59], %88 {strides = array<i32>} : memref<144x256xbf16, #tpu.memory_space<vmem>>, vector<16x256xbf16>,
    %c0_60 = arith.constant 0 : index
    %c113_61 = arith.constant 113 : index
    %90 = vector.load %arg7[%c0_60, %c113_61] : memref<16x401xbf16, #tpu.memory_space<vmem>>, vector<16x256xbf16>
    %cst_62 = arith.constant 0.000000e+00 : bf16
    %91 = vector.broadcast %cst_62 : bf16 to vector<16x256xbf16>
    %92 = vector.shape_cast %20 : vector<1x256xi1> to vector<1x256xi1>
    %93 = vector.broadcast %92 : vector<1x256xi1> to vector<16x256xi1>
    %94 = arith.select %93, %91, %90 : vector<16x256xi1>, vector<16x256xbf16>
    %c32_63 = arith.constant 32 : index
    %c0_64 = arith.constant 0 : index
    %95 = vector.load %arg8[%c32_63, %c0_64] : memref<144x256xbf16, #tpu.memory_space<vmem>>, vector<16x256xbf16>
    tpu.vector_store %arg8[%c32_63, %c0_64], %94 {strides = array<i32>} : memref<144x256xbf16, #tpu.memory_space<vmem>>, vector<16x256xbf16>,
    %c0_65 = arith.constant 0 : index
    %c127_66 = arith.constant 127 : index
    %96 = vector.load %arg7[%c0_65, %c127_66] : memref<16x401xbf16, #tpu.memory_space<vmem>>, vector<16x256xbf16>
    %cst_67 = arith.constant 0.000000e+00 : bf16
    %97 = vector.broadcast %cst_67 : bf16 to vector<16x256xbf16>
    %98 = vector.shape_cast %18 : vector<1x256xi1> to vector<1x256xi1>
    %99 = vector.broadcast %98 : vector<1x256xi1> to vector<16x256xi1>
    %100 = arith.select %99, %97, %96 : vector<16x256xi1>, vector<16x256xbf16>
    %c48_68 = arith.constant 48 : index
    %c0_69 = arith.constant 0 : index
    %101 = vector.load %arg8[%c48_68, %c0_69] : memref<144x256xbf16, #tpu.memory_space<vmem>>, vector<16x256xbf16>
    tpu.vector_store %arg8[%c48_68, %c0_69], %100 {strides = array<i32>} : memref<144x256xbf16, #tpu.memory_space<vmem>>, vector<16x256xbf16>,
    %c0_70 = arith.constant 0 : index
    %c128_71 = arith.constant 128 : index
    %102 = vector.load %arg7[%c0_70, %c128_71] : memref<16x401xbf16, #tpu.memory_space<vmem>>, vector<16x256xbf16>
    %c64_72 = arith.constant 64 : index
    %c0_73 = arith.constant 0 : index
    %103 = vector.load %arg8[%c64_72, %c0_73] : memref<144x256xbf16, #tpu.memory_space<vmem>>, vector<16x256xbf16>
    tpu.vector_store %arg8[%c64_72, %c0_73], %102 {strides = array<i32>} : memref<144x256xbf16, #tpu.memory_space<vmem>>, vector<16x256xbf16>,
    %c0_74 = arith.constant 0 : index
    %c129_75 = arith.constant 129 : index
    %104 = vector.load %arg7[%c0_74, %c129_75] : memref<16x401xbf16, #tpu.memory_space<vmem>>, vector<16x256xbf16>
    %cst_76 = arith.constant 0.000000e+00 : bf16
    %105 = vector.broadcast %cst_76 : bf16 to vector<16x256xbf16>
    %106 = vector.shape_cast %20 : vector<1x256xi1> to vector<1x256xi1>
    %107 = vector.broadcast %106 : vector<1x256xi1> to vector<16x256xi1>
    %108 = arith.select %107, %105, %104 : vector<16x256xi1>, vector<16x256xbf16>
    %c80_77 = arith.constant 80 : index
    %c0_78 = arith.constant 0 : index
    %109 = vector.load %arg8[%c80_77, %c0_78] : memref<144x256xbf16, #tpu.memory_space<vmem>>, vector<16x256xbf16>
    tpu.vector_store %arg8[%c80_77, %c0_78], %108 {strides = array<i32>} : memref<144x256xbf16, #tpu.memory_space<vmem>>, vector<16x256xbf16>,
    %c0_79 = arith.constant 0 : index
    %c143_80 = arith.constant 143 : index
    %110 = vector.load %arg7[%c0_79, %c143_80] : memref<16x401xbf16, #tpu.memory_space<vmem>>, vector<16x256xbf16>
    %cst_81 = arith.constant 0.000000e+00 : bf16
    %111 = vector.broadcast %cst_81 : bf16 to vector<16x256xbf16>
    %112 = vector.shape_cast %18 : vector<1x256xi1> to vector<1x256xi1>
    %113 = vector.broadcast %112 : vector<1x256xi1> to vector<16x256xi1>
    %114 = arith.select %113, %111, %110 : vector<16x256xi1>, vector<16x256xbf16>
    %c96_82 = arith.constant 96 : index
    %c0_83 = arith.constant 0 : index
    %115 = vector.load %arg8[%c96_82, %c0_83] : memref<144x256xbf16, #tpu.memory_space<vmem>>, vector<16x256xbf16>
    tpu.vector_store %arg8[%c96_82, %c0_83], %114 {strides = array<i32>} : memref<144x256xbf16, #tpu.memory_space<vmem>>, vector<16x256xbf16>,
    %c0_84 = arith.constant 0 : index
    %c144_85 = arith.constant 144 : index
    %116 = vector.load %arg7[%c0_84, %c144_85] : memref<16x401xbf16, #tpu.memory_space<vmem>>, vector<16x256xbf16>
    %c112_86 = arith.constant 112 : index
    %c0_87 = arith.constant 0 : index
    %117 = vector.load %arg8[%c112_86, %c0_87] : memref<144x256xbf16, #tpu.memory_space<vmem>>, vector<16x256xbf16>
    tpu.vector_store %arg8[%c112_86, %c0_87], %116 {strides = array<i32>} : memref<144x256xbf16, #tpu.memory_space<vmem>>, vector<16x256xbf16>,
    %c0_88 = arith.constant 0 : index
    %c145_89 = arith.constant 145 : index
    %118 = vector.load %arg7[%c0_88, %c145_89] : memref<16x401xbf16, #tpu.memory_space<vmem>>, vector<16x256xbf16>
    %cst_90 = arith.constant 0.000000e+00 : bf16
    %119 = vector.broadcast %cst_90 : bf16 to vector<16x256xbf16>
    %120 = vector.shape_cast %20 : vector<1x256xi1> to vector<1x256xi1>
    %121 = vector.broadcast %120 : vector<1x256xi1> to vector<16x256xi1>
    %122 = arith.select %121, %119, %118 : vector<16x256xi1>, vector<16x256xbf16>
    %c128_91 = arith.constant 128 : index
    %c0_92 = arith.constant 0 : index
    %123 = vector.load %arg8[%c128_91, %c0_92] : memref<144x256xbf16, #tpu.memory_space<vmem>>, vector<16x256xbf16>
    tpu.vector_store %arg8[%c128_91, %c0_92], %122 {strides = array<i32>} : memref<144x256xbf16, #tpu.memory_space<vmem>>, vector<16x256xbf16>,
    %c0_93 = arith.constant 0 : index
    %c0_94 = arith.constant 0 : index
    %124 = vector.load %arg4[%c0_93, %c0_94] : memref<16x144xbf16, #tpu.memory_space<vmem>>, vector<16x144xbf16>
    %c0_95 = arith.constant 0 : index
    %c0_96 = arith.constant 0 : index
    %125 = vector.load %arg8[%c0_95, %c0_96] : memref<144x256xbf16, #tpu.memory_space<vmem>>, vector<144x256xbf16>
    %cst_97 = arith.constant dense<0.000000e+00> : vector<16x256xf32>
    %126 = tpu.matmul %124, %125, %cst_97 {dimension_numbers = #tpu.dot_dimension_numbers<[1], [0], [0], [1], [0, 0, 1, 1], [], []>} : vector<16x144xbf16>, vector<144x256xbf16>, vector<16x256xf32> -> vector<16x256xf32>
    %127 = vector.broadcast %81 : vector<16x1xf32> to vector<16x256xf32>
    %128 = arith.addf %126, %127 : vector<16x256xf32>
    %c0_98 = arith.constant 0 : index
    %c0_99 = arith.constant 0 : index
    %c0_100 = arith.constant 0 : index
    %129 = vector.load %arg1[%c0_98, %c0_99, %c0_100] : memref<1x16x256xf32, #tpu.memory_space<vmem>>, vector<1x16x256xf32>
    %130 = vector.shape_cast %129 : vector<1x16x256xf32> to vector<16x256xf32>
    %131 = arith.addf %128, %130 : vector<16x256xf32>
    %cst_101 = arith.constant 0.000000e+00 : f32
    %132 = vector.broadcast %cst_101 : f32 to vector<16x256xf32>
    %133 = arith.maximumf %131, %132 : vector<16x256xf32>
    %c0_102 = arith.constant 0 : index
    %c0_103 = arith.constant 0 : index
    %c0_104 = arith.constant 0 : index
    %134 = vector.load %arg6[%c0_102, %c0_103, %c0_104] : memref<1x16x256xf32, #tpu.memory_space<vmem>>, vector<1x16x256xf32>
    %135 = vector.shape_cast %134 : vector<1x16x256xf32> to vector<16x256xf32>
    %136 = vector.shape_cast %133 : vector<16x256xf32> to vector<1x16x256xf32>
    tpu.vector_store %arg6[%c0_102, %c0_103, %c0_104], %136 {strides = array<i32>} : memref<1x16x256xf32, #tpu.memory_space<vmem>>, vector<1x16x256xf32>,
    return
  }
  func.func @transform_0(%arg0: i32) -> (i32, i32, i32) {
    %c0_i32 = arith.constant 0 : i32
    %c0_i32_0 = arith.constant 0 : i32
    %c0_i32_1 = arith.constant 0 : i32
    return %arg0, %c0_i32, %c0_i32_0 : i32, i32, i32
  }
  func.func @transform_1(%arg0: i32) -> (i32, i32) {
    %c0_i32 = arith.constant 0 : i32
    %c0_i32_0 = arith.constant 0 : i32
    %c0_i32_1 = arith.constant 0 : i32
    return %c0_i32, %c0_i32_0 : i32, i32
  }
  func.func @transform_2(%arg0: i32) -> (i32, i32) {
    %c0_i32 = arith.constant 0 : i32
    %c0_i32_0 = arith.constant 0 : i32
    %c0_i32_1 = arith.constant 0 : i32
    return %c0_i32, %c0_i32_0 : i32, i32
  }
  func.func @transform_3(%arg0: i32) -> (i32, i32) {
    %c0_i32 = arith.constant 0 : i32
    %c0_i32_0 = arith.constant 0 : i32
    %c0_i32_1 = arith.constant 0 : i32
    return %c0_i32, %c0_i32_0 : i32, i32
  }
  func.func @transform_4(%arg0: i32) -> (i32, i32) {
    %c0_i32 = arith.constant 0 : i32
    %c0_i32_0 = arith.constant 0 : i32
    %c0_i32_1 = arith.constant 0 : i32
    return %c0_i32, %c0_i32_0 : i32, i32
  }
  func.func @transform_5(%arg0: i32) -> (i32, i32, i32) {
    %c0_i32 = arith.constant 0 : i32
    %c0_i32_0 = arith.constant 0 : i32
    %c0_i32_1 = arith.constant 0 : i32
    return %arg0, %c0_i32, %c0_i32_0 : i32, i32, i32
  }
}

</mosaic_0001>

<llo_original>
// kernel: basic_block_forward.1
$region0: #{basic_block_forward.1}
  #allocation0 [shape = 'u32[]', space=smem, size = 0x4, offset = 0x4, fixed_abs, tag = 'smem constant byte address 0x4 - core index']
  #allocation1 [shape = 'u32[144,128]{1,0:T(1,128)}', space=vmem, size = 0x12000, scoped, tag = 'internal scratch']
  #allocation2 [shape = 'bf16[16,401]{1,0:T(16,128)(2,1)}', space=vmem, size = 0x4000, scoped, tag = 'scratch operand']
  #allocation3 [shape = 'bf16[144,256]{1,0:T(16,128)(2,1)}', space=vmem, size = 0x12000, scoped, tag = 'scratch operand']
  %s0 = inlined_call_operand.vmem [shape: f32[2,16,256], index: 0, kind: input, shape index: {}]
  %s1 = inlined_call_operand.vmem [shape: bf16[16,144], index: 1, kind: input, shape index: {}]
  %s2 = inlined_call_operand.vmem [shape: f32[16,1], index: 2, kind: input, shape index: {}]
  %s3 = inlined_call_operand.vmem [shape: bf16[16,144], index: 3, kind: input, shape index: {}]
  %s4 = inlined_call_operand.vmem [shape: f32[16,1], index: 4, kind: input, shape index: {}]
  %s5 = inlined_call_operand.vmem [shape: f32[2,16,256], index: 5, kind: output, shape index: {}]
  %s6 = sld [smem:[#allocation0]]
  $region53: #{basic_block_forward.1} parent=0
    _
  %s8 = ssub.s32 1, %s6
  %s9 = scalar_select 0, %s8, %s6
  loop: start=0, step=1, limit=4
  $region2: #{basic_block_forward.1} parent=0 // loop_pre_header
    _
  $region3: #{basic_block_forward.1} parent=0 // loop_header
    %s11 = sphi 0, %s15
    %p12 = scmp.ge.s32.totalorder %s11, 4
    %s21 = sphi 0, %s23
    %s24 = sphi 0, %s21
    %s25 = sphi 0, %s24
    %s41 = sphi 0, %s25
    %s45 = sphi 0, %s45
    %s47 = sphi 0, %s45
    %s48 = sphi 0, %s47
    %s62 = sphi 0, %s48
    %s66 = sphi 0, %s66
    %s68 = sphi 0, %s66
    %s69 = sphi 0, %s68
    %s83 = sphi 0, %s69
    %s87 = sphi 0, %s87
    %s89 = sphi 0, %s87
    %s90 = sphi 0, %s89
    %s104 = sphi 0, %s90
    %s108 = sphi 0, %s108
    %s110 = sphi 0, %s108
    %s111 = sphi 0, %s110
    %s125 = sphi 0, %s111
    %s131 = sphi 0, %s133
    %s134 = sphi 0, %s131
    %s135 = sphi 0, %s134
    %s151 = sphi 0, %s135
  $region4: #{basic_block_forward.1} parent=0 // loop_header_branch
    %14 = sbr.rel (%p12) target = $region8
  $region5: #{basic_block_forward.1} parent=0 // loop_body
    %s16 = ssub.s32 %s11, 1
    %s17 = ssub.s32 %s11, 2
    %s18 = sadd.s32 %s11, 1
    %s19 = ssub.s32 %s11, %s18
    %p20 = scmp.eq.s32.totalorder %s19, 0
    %s22 = sadd.s32 %s21, 1
    %s23 = scalar_select %p20, %s21, %s22
    %p26 = pneg %p20
    %p27 = scmp.eq.s32.totalorder %s11, 1
    %p28 = por %p26, %p27
    %p29 = scmp.ne.s32.totalorder %s21, %s24
    %p30 = scmp.eq.s32.totalorder %s11, 0
    %p31 = por %p29, %p30
    %p32 = scmp.ne.s32.totalorder %s21, %s24
    %p33 = scmp.eq.s32.totalorder %s16, 1
    %p34 = por %p32, %p33
    %p35 = scmp.ne.s32.totalorder %s24, %s25
    %p36 = scmp.eq.s32.totalorder %s16, 0
    %p37 = por %p35, %p36
    %p38 = scmp.ne.s32.totalorder %s24, %s25
    %p39 = scmp.eq.s32.totalorder %s17, 1
    %p40 = por %p38, %p39
    %p42 = scmp.ne.s32.totalorder %s25, %s41
    %p43 = scmp.eq.s32.totalorder %s17, 0
    %p44 = por %p42, %p43
    %s46 = sadd.s32 %s45, 1
    %p49 = scmp.eq.s32.totalorder %s11, 1
    %p50 = scmp.ne.s32.totalorder %s45, %s47
    %p51 = scmp.eq.s32.totalorder %s11, 0
    %p52 = por %p50, %p51
    %p53 = scmp.ne.s32.totalorder %s45, %s47
    %p54 = scmp.eq.s32.totalorder %s16, 1
    %p55 = por %p53, %p54
    %p56 = scmp.ne.s32.totalorder %s47, %s48
    %p57 = scmp.eq.s32.totalorder %s16, 0
    %p58 = por %p56, %p57
    %p59 = scmp.ne.s32.totalorder %s47, %s48
    %p60 = scmp.eq.s32.totalorder %s17, 1
    %p61 = por %p59, %p60
    %p63 = scmp.ne.s32.totalorder %s48, %s62
    %p64 = scmp.eq.s32.totalorder %s17, 0
    %p65 = por %p63, %p64
    %s67 = sadd.s32 %s66, 1
    %p70 = scmp.eq.s32.totalorder %s11, 1
    %p71 = scmp.ne.s32.totalorder %s66, %s68
    %p72 = scmp.eq.s32.totalorder %s11, 0
    %p73 = por %p71, %p72
    %p74 = scmp.ne.s32.totalorder %s66, %s68
    %p75 = scmp.eq.s32.totalorder %s16, 1
    %p76 = por %p74, %p75
    %p77 = scmp.ne.s32.totalorder %s68, %s69
    %p78 = scmp.eq.s32.totalorder %s16, 0
    %p79 = por %p77, %p78
    %p80 = scmp.ne.s32.totalorder %s68, %s69
    %p81 = scmp.eq.s32.totalorder %s17, 1
    %p82 = por %p80, %p81
    %p84 = scmp.ne.s32.totalorder %s69, %s83
    %p85 = scmp.eq.s32.totalorder %s17, 0
    %p86 = por %p84, %p85
    %s88 = sadd.s32 %s87, 1
    %p91 = scmp.eq.s32.totalorder %s11, 1
    %p92 = scmp.ne.s32.totalorder %s87, %s89
    %p93 = scmp.eq.s32.totalorder %s11, 0
    %p94 = por %p92, %p93
    %p95 = scmp.ne.s32.totalorder %s87, %s89
    %p96 = scmp.eq.s32.totalorder %s16, 1
    %p97 = por %p95, %p96
    %p98 = scmp.ne.s32.totalorder %s89, %s90
    %p99 = scmp.eq.s32.totalorder %s16, 0
    %p100 = por %p98, %p99
    %p101 = scmp.ne.s32.totalorder %s89, %s90
    %p102 = scmp.eq.s32.totalorder %s17, 1
    %p103 = por %p101, %p102
    %p105 = scmp.ne.s32.totalorder %s90, %s104
    %p106 = scmp.eq.s32.totalorder %s17, 0
    %p107 = por %p105, %p106
    %s109 = sadd.s32 %s108, 1
    %p112 = scmp.eq.s32.totalorder %s11, 1
    %p113 = scmp.ne.s32.totalorder %s108, %s110
    %p114 = scmp.eq.s32.totalorder %s11, 0
    %p115 = por %p113, %p114
    %p116 = scmp.ne.s32.totalorder %s108, %s110
    %p117 = scmp.eq.s32.totalorder %s16, 1
    %p118 = por %p116, %p117
    %p119 = scmp.ne.s32.totalorder %s110, %s111
    %p120 = scmp.eq.s32.totalorder %s16, 0
    %p121 = por %p119, %p120
    %p122 = scmp.ne.s32.totalorder %s110, %s111
    %p123 = scmp.eq.s32.totalorder %s17, 1
    %p124 = por %p122, %p123
    %p126 = scmp.ne.s32.totalorder %s111, %s125
    %p127 = scmp.eq.s32.totalorder %s17, 0
    %p128 = por %p126, %p127
    %s129 = ssub.s32 %s11, %s18
    %p130 = scmp.eq.s32.totalorder %s129, 0
    %s132 = sadd.s32 %s131, 1
    %s133 = scalar_select %p130, %s131, %s132
    %p136 = pneg %p130
    %p137 = scmp.eq.s32.totalorder %s11, 1
    %p138 = por %p136, %p137
    %p139 = scmp.ne.s32.totalorder %s131, %s134
    %p140 = scmp.eq.s32.totalorder %s11, 0
    %p141 = por %p139, %p140
    %p142 = scmp.ne.s32.totalorder %s131, %s134
    %p143 = scmp.eq.s32.totalorder %s16, 1
    %p144 = por %p142, %p143
    %p145 = scmp.ne.s32.totalorder %s134, %s135
    %p146 = scmp.eq.s32.totalorder %s16, 0
    %p147 = por %p145, %p146
    %p148 = scmp.ne.s32.totalorder %s134, %s135
    %p149 = scmp.eq.s32.totalorder %s17, 1
    %p150 = por %p148, %p149
    %p152 = scmp.ne.s32.totalorder %s135, %s151
    %p153 = scmp.eq.s32.totalorder %s17, 0
    %p154 = por %p152, %p153
    %p155 = scmp.le.s32.totalorder 1, %s11
    %p156 = scmp.lt.s32.totalorder %s11, 3
    %p157 = pnand %p155, %p156
    %p158 = pneg %p157
    // Predicated region
    $region9: #{basic_block_forward.1} parent=5 // pred_check
      _
    $region10: #{basic_block_forward.1} parent=5 // pred_check_branch
      %160 = sbr.rel (%p157) target = $region12
    $region11: #{basic_block_forward.1} parent=5 // pred_region
      %s161 = ssub.s32 %s11, 1
      // Predicated region
      $region13: #{basic_block_forward.1} parent=11 // pred_check
        %p162 = pneg %p58
      $region14: #{basic_block_forward.1} parent=11 // pred_check_branch
        %164 = sbr.rel (%p162) target = $region16
      $region15: #{basic_block_forward.1} parent=11 // pred_region
        _
      $region16: #{basic_block_forward.1} parent=11 // pred_fallthru
        _
      // Predicated region
      $region17: #{basic_block_forward.1} parent=11 // pred_check
        %p165 = pneg %p79
      $region18: #{basic_block_forward.1} parent=11 // pred_check_branch
        %167 = sbr.rel (%p165) target = $region20
      $region19: #{basic_block_forward.1} parent=11 // pred_region
        _
      $region20: #{basic_block_forward.1} parent=11 // pred_fallthru
        _
      // Predicated region
      $region21: #{basic_block_forward.1} parent=11 // pred_check
        %p168 = pneg %p100
      $region22: #{basic_block_forward.1} parent=11 // pred_check_branch
        %170 = sbr.rel (%p168) target = $region24
      $region23: #{basic_block_forward.1} parent=11 // pred_region
        _
      $region24: #{basic_block_forward.1} parent=11 // pred_fallthru
        _
      // Predicated region
      $region25: #{basic_block_forward.1} parent=11 // pred_check
        %p171 = pneg %p121
      $region26: #{basic_block_forward.1} parent=11 // pred_check_branch
        %173 = sbr.rel (%p171) target = $region28
      $region27: #{basic_block_forward.1} parent=11 // pred_region
        _
      $region28: #{basic_block_forward.1} parent=11 // pred_fallthru
        _
    $region12: #{basic_block_forward.1} parent=5 // pred_fallthru
      _
    %p174 = scmp.lt.s32.totalorder %s11, 2
    // Predicated region
    $region29: #{basic_block_forward.1} parent=5 // pred_check
      %p175 = pneg %p174
    $region30: #{basic_block_forward.1} parent=5 // pred_check_branch
      %177 = sbr.rel (%p175) target = $region32
    $region31: #{basic_block_forward.1} parent=5 // pred_region
      // Predicated region
      $region33: #{basic_block_forward.1} parent=31 // pred_check
        %p178 = pneg %p31
      $region34: #{basic_block_forward.1} parent=31 // pred_check_branch
        %180 = sbr.rel (%p178) target = $region36
      $region35: #{basic_block_forward.1} parent=31 // pred_region
        %p181 = scmp.lt.s32.totalorder %s11, 1
        %s182 = scalar_select %p181, %s11, 1
        %s183 = smul.addr %s182, 4
        %s184 = smul.addr %s183, 8
        %s185 = scalar_lea.vmem %s0, %s184
      $region36: #{basic_block_forward.1} parent=31 // pred_fallthru
        _
    $region32: #{basic_block_forward.1} parent=5 // pred_fallthru
      _
    %p186 = scmp.le.s32.totalorder 1, %s11
    %p187 = scmp.lt.s32.totalorder %s11, 3
    %p188 = pnand %p186, %p187
    %p189 = pneg %p188
    // Predicated region
    $region37: #{basic_block_forward.1} parent=5 // pred_check
      _
    $region38: #{basic_block_forward.1} parent=5 // pred_check_branch
      %191 = sbr.rel (%p188) target = $region40
    $region39: #{basic_block_forward.1} parent=5 // pred_region
      %s192 = ssub.s32 %s11, 1
      %p193 = scmp.lt.s32.totalorder %s16, 1
      %s194 = scalar_select %p193, %s16, 1
      %s195 = smul.addr %s194, 4
      %s196 = smul.addr %s195, 8
      %s197 = scalar_lea.vmem %s0, %s196
      %p198 = pneg %p37
      %p199 = pneg %p34
      %p200 = pneg %p58
      %p201 = pneg %p55
      %p202 = pneg %p79
      %p203 = pneg %p76
      %p204 = pneg %p100
      %p205 = pneg %p97
      %p206 = pneg %p121
      %p207 = pneg %p118
      %p208 = pneg %p147
      %p209 = pneg %p144
      %p210 = scmp.lt.s32.totalorder %s16, 1
      %s211 = scalar_select %p210, %s16, 1
      %s212 = smul.addr %s211, 4
      %s213 = smul.addr %s212, 8
      %s214 = scalar_lea.vmem %s5, %s213
      %p215 = scmp.lt.s32.totalorder %s16, 1
      %s216 = scalar_select %p215, %s16, 1
      %s217 = smul.addr %s216, 4
      %s218 = smul.addr %s217, 8
      %s219 = scalar_lea.vmem %s0, %s218
      %p220 = scmp.lt.s32.totalorder %s16, 1
      %s221 = scalar_select %p220, %s16, 1
      %s222 = smul.addr %s221, 4
      %s223 = smul.addr %s222, 8
      %s224 = scalar_lea.vmem %s5, %s223
      %v228 = vlaneseq
      %v229 = vand.u32 %v228, 127
      %v230 = vadd.s32 %v229, 128
      %vm231 = vcmp.lt.s32.totalorder %v229, 0
      %v232 = vsub.s32 0, %v229
      %v233 = vsel %vm231, %v232, %v229
      %v234 = vshrl.u32 %v233, 4
      %v235 = vand.u32 %v233, 15
      %v236 = vsub.s32 0, %v235
      %v237 = vsel %vm231, %v236, %v235
      %vm238 = vcmp.lt.s32.totalorder %v230, 0
      %v239 = vsub.s32 0, %v230
      %v240 = vsel %vm238, %v239, %v230
      %v241 = vshrl.u32 %v240, 4
      %v242 = vand.u32 %v240, 15
      %v243 = vsub.s32 0, %v242
      %v244 = vsel %vm238, %v243, %v242
      %vm245 = vcmp.ne.s32.totalorder %v237, 0
      %vm246 = vcmp.ne.s32.totalorder %v244, 0
      %vm247 = vcmp.lt.s32.totalorder %v237, 0
      %vm248 = vcmp.lt.s32.totalorder %v244, 0
      %vm249 = vmand %vm247, %vm245
      %vm250 = vmand %vm248, %vm246
      %v251 = vadd.s32 %v237, 16
      %v252 = vadd.s32 %v244, 16
      %v253 = vsel %vm249, %v251, %v237
      %v254 = vsel %vm250, %v252, %v244
      %vm255 = vcmp.eq.s32.totalorder %v253, 0
      %vm256 = vcmp.eq.s32.totalorder %v254, 0
      %vm257 = vcmp.eq.s32.totalorder %v253, 15
      %vm258 = vcmp.eq.s32.totalorder %v254, 15
      %259 = vst [vmem:[#allocation2] sm:$0xff] 0
      %vm260 = vcmask 138240
      %261 = vst.msk [vmem:[#allocation2 + $0x18] sm:$0xff] %vm260, 0
      %v262 = vld [vmem:[%s219] sm:$0xff]
      %v263 = vld [vmem:[%s219 + $0x8] sm:$0xff]
      %v264 = vld [vmem:[%s219 + $0x10] sm:$0xff]
      %v265 = vld [vmem:[%s219 + $0x18] sm:$0xff]
      %v266 = vpack.c.bf16 %v264, %v262
      %v267 = vpack.c.bf16 %v265, %v263
      %268 = vst [vmem:[#allocation2 + $0x8] sm:$0xff] %v266
      %269 = vst [vmem:[#allocation2 + $0x10] sm:$0xff] %v267
      %v270 = vld [vmem:[%s2] sm:$0xff]
      %v271 = vld [vmem:[%s2 + $0x8] sm:$0xff]
      %v272 = vld [vmem:[#allocation2] sm:$0xff]
      %v273 = vld [vmem:[#allocation2 + $0x8] sm:$0xff]
      %v274 = vld [vmem:[#allocation2 + $0x10] sm:$0xff]
      %v275 = vsel %vm255, 1, 0
      %v276 = vsel %vm256, 1, 0
      %vm277 = vcmp.eq.s32.totalorder %v275, 1
      %vm278 = vcmp.eq.s32.totalorder %v276, 1
      %vm279 = vmpackc.low %vm278, %vm277
      %v280 = vsel %vm279, 65537, 0
      %v281 = vlaneseq
      %v282 = vshrl.u32 %v281, 7
      %v283 = vsub.s32 0, %v282
      %v284 = vrot.slane %v280, %v283
      %v285 = vlaneseq
      %v286 = vshrl.u32 %v285, 7
      %v287 = vsub.s32 4, %v286
      %v288 = vrot.slane %v280, %v287
      %289 = vrot.lane.b32.xlu0 %v284, 111
      %v290 = vpop.permute.xlu0 %289
      %291 = vrot.lane.b32.xlu0 %v288, 111
      %v292 = vpop.permute.xlu0 %291
      %vm293 = vcmask 908288
      %v294 = vsel %vm293, %v290, %v292
      %vm295 = vcmp.ne.s16.totalorder %v290, 0
      %vm296 = vcmp.ne.s16.totalorder %v294, 0
      %vm297 = vcmp.ne.s16.totalorder %v292, 0
      %v298 = vsel %vm295, 0, %v272
      %v299 = vsel %vm296, 0, %v273
      %v300 = vsel %vm297, 0, %v274
      %304 = vrot.lane.b32.xlu0 %v298, 17
      %v305 = vpop.permute.xlu0 %304
      %306 = vrot.lane.b32.xlu0 %v299, 17
      %v307 = vpop.permute.xlu0 %306
      %308 = vrot.lane.b32.xlu0 %v300, 17
      %v309 = vpop.permute.xlu0 %308
      %vm310 = vcmask 138240
      %v311 = vsel %vm310, %v305, %v307
      %v312 = vsel %vm310, %v307, %v309
      %315 = vst [vmem:[#allocation3] sm:$0xff] %v311
      %316 = vst [vmem:[#allocation3 + $0x8] sm:$0xff] %v312
      %v317 = vld [vmem:[#allocation2] sm:$0xff]
      %v318 = vld [vmem:[#allocation2 + $0x8] sm:$0xff]
      %v319 = vld [vmem:[#allocation2 + $0x10] sm:$0xff]
      %323 = vrot.lane.b32.xlu0 %v317, 16
      %v324 = vpop.permute.xlu0 %323
      %325 = vrot.lane.b32.xlu0 %v318, 16
      %v326 = vpop.permute.xlu0 %325
      %327 = vrot.lane.b32.xlu0 %v319, 16
      %v328 = vpop.permute.xlu0 %327
      %vm329 = vcmask 130048
      %v330 = vsel %vm329, %v324, %v326
      %v331 = vsel %vm329, %v326, %v328
      %334 = vst [vmem:[#allocation3 + $0x10] sm:$0xff] %v330
      %335 = vst [vmem:[#allocation3 + $0x18] sm:$0xff] %v331
      %v336 = vld [vmem:[#allocation2] sm:$0xff]
      %v337 = vld [vmem:[#allocation2 + $0x8] sm:$0xff]
      %v338 = vld [vmem:[#allocation2 + $0x10] sm:$0xff]
      %v339 = vsel %vm257, 1, 0
      %v340 = vsel %vm258, 1, 0
      %vm341 = vcmp.eq.s32.totalorder %v339, 1
      %vm342 = vcmp.eq.s32.totalorder %v340, 1
      %vm343 = vmpackc.low %vm342, %vm341
      %v344 = vsel %vm343, 65537, 0
      %v345 = vlaneseq
      %v346 = vshrl.u32 %v345, 7
      %v347 = vsub.s32 0, %v346
      %v348 = vrot.slane %v344, %v347
      %v349 = vlaneseq
      %v350 = vshrl.u32 %v349, 7
      %v351 = vsub.s32 4, %v350
      %v352 = vrot.slane %v344, %v351
      %353 = vrot.lane.b32.xlu0 %v348, 113
      %v354 = vpop.permute.xlu0 %353
      %355 = vrot.lane.b32.xlu0 %v352, 113
      %v356 = vpop.permute.xlu0 %355
      %vm357 = vcmask 924672
      %v358 = vsel %vm357, %v354, %v356
      %vm359 = vcmp.ne.s16.totalorder %v354, 0
      %vm360 = vcmp.ne.s16.totalorder %v358, 0
      %vm361 = vcmp.ne.s16.totalorder %v356, 0
      %v362 = vsel %vm359, 0, %v336
      %v363 = vsel %vm360, 0, %v337
      %v364 = vsel %vm361, 0, %v338
      %368 = vrot.lane.b32.xlu0 %v362, 15
      %v369 = vpop.permute.xlu0 %368
      %370 = vrot.lane.b32.xlu0 %v363, 15
      %v371 = vpop.permute.xlu0 %370
      %372 = vrot.lane.b32.xlu0 %v364, 15
      %v373 = vpop.permute.xlu0 %372
      %vm374 = vcmask 121856
      %v375 = vsel %vm374, %v369, %v371
      %v376 = vsel %vm374, %v371, %v373
      %379 = vst [vmem:[#allocation3 + $0x20] sm:$0xff] %v375
      %380 = vst [vmem:[#allocation3 + $0x28] sm:$0xff] %v376
      %v381 = vld [vmem:[#allocation2] sm:$0xff]
      %v382 = vld [vmem:[#allocation2 + $0x8] sm:$0xff]
      %v383 = vld [vmem:[#allocation2 + $0x10] sm:$0xff]
      %384 = vrot.lane.b32.xlu0 %v284, 127
      %v385 = vpop.permute.xlu0 %384
      %386 = vrot.lane.b32.xlu0 %v288, 127
      %v387 = vpop.permute.xlu0 %386
      %vm388 = vcmask 1039360
      %v389 = vsel %vm388, %v385, %v387
      %vm390 = vcmp.ne.s16.totalorder %v385, 0
      %vm391 = vcmp.ne.s16.totalorder %v389, 0
      %vm392 = vcmp.ne.s16.totalorder %v387, 0
      %v393 = vsel %vm390, 0, %v381
      %v394 = vsel %vm391, 0, %v382
      %v395 = vsel %vm392, 0, %v383
      %399 = vrot.lane.b32.xlu0 %v393, 1
      %v400 = vpop.permute.xlu0 %399
      %401 = vrot.lane.b32.xlu0 %v394, 1
      %v402 = vpop.permute.xlu0 %401
      %403 = vrot.lane.b32.xlu0 %v395, 1
      %v404 = vpop.permute.xlu0 %403
      %vm405 = vcmask 7168
      %v406 = vsel %vm405, %v400, %v402
      %v407 = vsel %vm405, %v402, %v404
      %410 = vst [vmem:[#allocation3 + $0x30] sm:$0xff] %v406
      %411 = vst [vmem:[#allocation3 + $0x38] sm:$0xff] %v407
      %v412 = vld [vmem:[#allocation2 + $0x8] sm:$0xff]
      %v413 = vld [vmem:[#allocation2 + $0x10] sm:$0xff]
      %414 = vst [vmem:[#allocation3 + $0x40] sm:$0xff] %v412
      %415 = vst [vmem:[#allocation3 + $0x48] sm:$0xff] %v413
      %v416 = vld [vmem:[#allocation2 + $0x8] sm:$0xff]
      %v417 = vld [vmem:[#allocation2 + $0x10] sm:$0xff]
      %v418 = vld [vmem:[#allocation2 + $0x18] sm:$0xff]
      %419 = vrot.lane.b32.xlu0 %v348, 1
      %v420 = vpop.permute.xlu0 %419
      %421 = vrot.lane.b32.xlu0 %v352, 1
      %v422 = vpop.permute.xlu0 %421
      %v423 = vsel %vm405, %v420, %v422
      %vm424 = vcmp.ne.s16.totalorder %v420, 0
      %vm425 = vcmp.ne.s16.totalorder %v423, 0
      %vm426 = vcmp.ne.s16.totalorder %v422, 0
      %v427 = vsel %vm424, 0, %v416
      %v428 = vsel %vm425, 0, %v417
      %v429 = vsel %vm426, 0, %v418
      %433 = vrot.lane.b32.xlu0 %v427, 127
      %v434 = vpop.permute.xlu0 %433
      %435 = vrot.lane.b32.xlu0 %v428, 127
      %v436 = vpop.permute.xlu0 %435
      %437 = vrot.lane.b32.xlu0 %v429, 127
      %v438 = vpop.permute.xlu0 %437
      %v439 = vsel %vm388, %v434, %v436
      %v440 = vsel %vm388, %v436, %v438
      %443 = vst [vmem:[#allocation3 + $0x50] sm:$0xff] %v439
      %444 = vst [vmem:[#allocation3 + $0x58] sm:$0xff] %v440
      %v445 = vld [vmem:[#allocation2 + $0x8] sm:$0xff]
      %v446 = vld [vmem:[#allocation2 + $0x10] sm:$0xff]
      %v447 = vld [vmem:[#allocation2 + $0x18] sm:$0xff]
      %448 = vrot.lane.b32.xlu0 %v284, 15
      %v449 = vpop.permute.xlu0 %448
      %450 = vrot.lane.b32.xlu0 %v288, 15
      %v451 = vpop.permute.xlu0 %450
      %v452 = vsel %vm374, %v449, %v451
      %vm453 = vcmp.ne.s16.totalorder %v449, 0
      %vm454 = vcmp.ne.s16.totalorder %v452, 0
      %vm455 = vcmp.ne.s16.totalorder %v451, 0
      %v456 = vsel %vm453, 0, %v445
      %v457 = vsel %vm454, 0, %v446
      %v458 = vsel %vm455, 0, %v447
      %462 = vrot.lane.b32.xlu0 %v456, 113
      %v463 = vpop.permute.xlu0 %462
      %464 = vrot.lane.b32.xlu0 %v457, 113
      %v465 = vpop.permute.xlu0 %464
      %466 = vrot.lane.b32.xlu0 %v458, 113
      %v467 = vpop.permute.xlu0 %466
      %v468 = vsel %vm357, %v463, %v465
      %v469 = vsel %vm357, %v465, %v467
      %472 = vst [vmem:[#allocation3 + $0x60] sm:$0xff] %v468
      %473 = vst [vmem:[#allocation3 + $0x68] sm:$0xff] %v469
      %v474 = vld [vmem:[#allocation2 + $0x8] sm:$0xff]
      %v475 = vld [vmem:[#allocation2 + $0x10] sm:$0xff]
      %v476 = vld [vmem:[#allocation2 + $0x18] sm:$0xff]
      %480 = vrot.lane.b32.xlu0 %v474, 112
      %v481 = vpop.permute.xlu0 %480
      %482 = vrot.lane.b32.xlu0 %v475, 112
      %v483 = vpop.permute.xlu0 %482
      %484 = vrot.lane.b32.xlu0 %v476, 112
      %v485 = vpop.permute.xlu0 %484
      %vm486 = vcmask 916480
      %v487 = vsel %vm486, %v481, %v483
      %v488 = vsel %vm486, %v483, %v485
      %491 = vst [vmem:[#allocation3 + $0x70] sm:$0xff] %v487
      %492 = vst [vmem:[#allocation3 + $0x78] sm:$0xff] %v488
      %v493 = vld [vmem:[#allocation2 + $0x8] sm:$0xff]
      %v494 = vld [vmem:[#allocation2 + $0x10] sm:$0xff]
      %v495 = vld [vmem:[#allocation2 + $0x18] sm:$0xff]
      %496 = vrot.lane.b32.xlu0 %v348, 17
      %v497 = vpop.permute.xlu0 %496
      %498 = vrot.lane.b32.xlu0 %v352, 17
      %v499 = vpop.permute.xlu0 %498
      %v500 = vsel %vm310, %v497, %v499
      %vm501 = vcmp.ne.s16.totalorder %v497, 0
      %vm502 = vcmp.ne.s16.totalorder %v500, 0
      %vm503 = vcmp.ne.s16.totalorder %v499, 0
      %v504 = vsel %vm501, 0, %v493
      %v505 = vsel %vm502, 0, %v494
      %v506 = vsel %vm503, 0, %v495
      %510 = vrot.lane.b32.xlu0 %v504, 111
      %v511 = vpop.permute.xlu0 %510
      %512 = vrot.lane.b32.xlu0 %v505, 111
      %v513 = vpop.permute.xlu0 %512
      %514 = vrot.lane.b32.xlu0 %v506, 111
      %v515 = vpop.permute.xlu0 %514
      %v516 = vsel %vm293, %v511, %v513
      %v517 = vsel %vm293, %v513, %v515
      %520 = vst [vmem:[#allocation3 + $0x80] sm:$0xff] %v516
      %521 = vst [vmem:[#allocation3 + $0x88] sm:$0xff] %v517
      %v522 = vld [vmem:[%s1] sm:$0xff]
      %v523 = vld [vmem:[%s1 + $0x8] sm:$0xff]
      %v524 = vld [vmem:[#allocation3] sm:$0xff]
      %v525 = vld [vmem:[#allocation3 + $0x8] sm:$0xff]
      %v526 = vld [vmem:[#allocation3 + $0x10] sm:$0xff]
      %v527 = vld [vmem:[#allocation3 + $0x18] sm:$0xff]
      %v528 = vld [vmem:[#allocation3 + $0x20] sm:$0xff]
      %v529 = vld [vmem:[#allocation3 + $0x28] sm:$0xff]
      %v530 = vld [vmem:[#allocation3 + $0x30] sm:$0xff]
      %v531 = vld [vmem:[#allocation3 + $0x38] sm:$0xff]
      %v532 = vld [vmem:[#allocation3 + $0x40] sm:$0xff]
      %v533 = vld [vmem:[#allocation3 + $0x48] sm:$0xff]
      %v534 = vld [vmem:[#allocation3 + $0x50] sm:$0xff]
      %v535 = vld [vmem:[#allocation3 + $0x58] sm:$0xff]
      %v536 = vld [vmem:[#allocation3 + $0x60] sm:$0xff]
      %v537 = vld [vmem:[#allocation3 + $0x68] sm:$0xff]
      %v538 = vld [vmem:[#allocation3 + $0x70] sm:$0xff]
      %v539 = vld [vmem:[#allocation3 + $0x78] sm:$0xff]
      %v540 = vld [vmem:[#allocation3 + $0x80] sm:$0xff]
      %v541 = vld [vmem:[#allocation3 + $0x88] sm:$0xff]
      %543 = vset.pattern.permute.xlu0 0
      %544 = vperm.xlu0 %543, %v270
      %v545 = vpop.permute.xlu0 %544
      %548 = vset.pattern.permute.xlu0 0
      %549 = vperm.xlu0 %548, %v271
      %v550 = vpop.permute.xlu0 %549
      %v554 = vunpack.c.l.b16 %v522
      %v555 = vunpack.c.h.b16 %v522
      %v556 = vunpack.c.l.b16 %v523
      %v557 = vunpack.c.h.b16 %v523
      %v558 = vpack.c.b16 %v556, %v554
      %v559 = vpack.c.b16 %v557, %v555
      %vm561 = vcmask 130048
      %v563 = vsel %vm561, %v559, 0
      %565 = vmatprep.subr.bf16.mxu0 %v525
      %566 = vmatpush1.bf16.msra.mxu0 %v524
      %567 = vmatprep.subr.bf16.mxu0 %v527
      %568 = vmatpush1.bf16.msra.mxu0 %v526
      %569 = vmatprep.subr.bf16.mxu0 %v529
      %570 = vmatpush1.bf16.msra.mxu0 %v528
      %571 = vmatprep.subr.bf16.mxu0 %v531
      %572 = vmatpush1.bf16.msra.mxu0 %v530
      %573 = vmatprep.subr.bf16.mxu0 %v533
      %574 = vmatpush1.bf16.msra.mxu0 %v532
      %575 = vmatprep.subr.bf16.mxu0 %v535
      %576 = vmatpush1.bf16.msra.mxu0 %v534
      %577 = vmatprep.subr.bf16.mxu0 %v537
      %578 = vmatpush1.bf16.msra.mxu0 %v536
      %579 = vmatprep.subr.bf16.mxu0 %v539
      %580 = vmatpush1.bf16.msra.mxu0 %v538
      %581 = vmatprep.subr.bf16.mxu0 %v541
      %582 = vmatpush1.bf16.msra.mxu0 %v540
      %583 = vmatprep.subr.bf16.mxu0 0
      %584 = vmatpush1.bf16.msra.mxu0 0
      %585 = vmatprep.subr.bf16.mxu0 0
      %586 = vmatpush1.bf16.msra.mxu0 0
      %587 = vmatprep.subr.bf16.mxu0 0
      %588 = vmatpush1.bf16.msra.mxu0 0
      %589 = vmatprep.subr.bf16.mxu0 0
      %590 = vmatpush1.bf16.msra.mxu0 0
      %591 = vmatprep.subr.bf16.mxu0 0
      %592 = vmatpush1.bf16.msra.mxu0 0
      %593 = vmatprep.subr.bf16.mxu0 0
      %594 = vmatpush1.bf16.msra.mxu0 0
      %595 = vmatprep.subr.bf16.mxu0 0
      %596 = vmatpush1.bf16.msra.mxu0 0
      %597 = vmatprep.mubr.bf16.mxu0 %v563
      %598 = vmatmul.mubr.bf16.gmra.mrb[0].mxu0 %v558
      %v599 = vpop.f32.mrb[0].mxu0
      %v600 = vadd.f32 %v545, %v599
      %v601 = vpop.f32.mrb[0].mxu0
      %v602 = vadd.f32 %v545, %v601
      %v603 = vpop.f32.mrb[0].mxu0
      %v604 = vadd.f32 %v550, %v603
      %v605 = vpop.f32.mrb[0].mxu0
      %v606 = vadd.f32 %v550, %v605
      %607 = vdwg.mxu0
      %v608 = vmax.f32 %v600, 0.0
      %v609 = vmax.f32 %v602, 0.0
      %v610 = vmax.f32 %v604, 0.0
      %v611 = vmax.f32 %v606, 0.0
      %v612 = vpack.c.bf16 %v610, %v608
      %v613 = vpack.c.bf16 %v611, %v609
      %614 = vst [vmem:[#allocation2 + $0x8] sm:$0xff] %v612
      %615 = vst [vmem:[#allocation2 + $0x10] sm:$0xff] %v613
      %v616 = vld [vmem:[%s4] sm:$0xff]
      %v617 = vld [vmem:[%s4 + $0x8] sm:$0xff]
      %v618 = vld [vmem:[#allocation2] sm:$0xff]
      %v619 = vld [vmem:[#allocation2 + $0x8] sm:$0xff]
      %v620 = vld [vmem:[#allocation2 + $0x10] sm:$0xff]
      %v621 = vsel %vm295, 0, %v618
      %v622 = vsel %vm296, 0, %v619
      %v623 = vsel %vm297, 0, %v620
      %627 = vrot.lane.b32.xlu0 %v621, 17
      %v628 = vpop.permute.xlu0 %627
      %629 = vrot.lane.b32.xlu0 %v622, 17
      %v630 = vpop.permute.xlu0 %629
      %631 = vrot.lane.b32.xlu0 %v623, 17
      %v632 = vpop.permute.xlu0 %631
      %v633 = vsel %vm310, %v628, %v630
      %v634 = vsel %vm310, %v630, %v632
      %637 = vst [vmem:[#allocation3] sm:$0xff] %v633
      %638 = vst [vmem:[#allocation3 + $0x8] sm:$0xff] %v634
      %v639 = vld [vmem:[#allocation2] sm:$0xff]
      %v640 = vld [vmem:[#allocation2 + $0x8] sm:$0xff]
      %v641 = vld [vmem:[#allocation2 + $0x10] sm:$0xff]
      %645 = vrot.lane.b32.xlu0 %v639, 16
      %v646 = vpop.permute.xlu0 %645
      %647 = vrot.lane.b32.xlu0 %v640, 16
      %v648 = vpop.permute.xlu0 %647
      %649 = vrot.lane.b32.xlu0 %v641, 16
      %v650 = vpop.permute.xlu0 %649
      %v651 = vsel %vm329, %v646, %v648
      %v652 = vsel %vm329, %v648, %v650
      %655 = vst [vmem:[#allocation3 + $0x10] sm:$0xff] %v651
      %656 = vst [vmem:[#allocation3 + $0x18] sm:$0xff] %v652
      %v657 = vld [vmem:[#allocation2] sm:$0xff]
      %v658 = vld [vmem:[#allocation2 + $0x8] sm:$0xff]
      %v659 = vld [vmem:[#allocation2 + $0x10] sm:$0xff]
      %v660 = vsel %vm359, 0, %v657
      %v661 = vsel %vm360, 0, %v658
      %v662 = vsel %vm361, 0, %v659
      %666 = vrot.lane.b32.xlu0 %v660, 15
      %v667 = vpop.permute.xlu0 %666
      %668 = vrot.lane.b32.xlu0 %v661, 15
      %v669 = vpop.permute.xlu0 %668
      %670 = vrot.lane.b32.xlu0 %v662, 15
      %v671 = vpop.permute.xlu0 %670
      %v672 = vsel %vm374, %v667, %v669
      %v673 = vsel %vm374, %v669, %v671
      %676 = vst [vmem:[#allocation3 + $0x20] sm:$0xff] %v672
      %677 = vst [vmem:[#allocation3 + $0x28] sm:$0xff] %v673
      %v678 = vld [vmem:[#allocation2] sm:$0xff]
      %v679 = vld [vmem:[#allocation2 + $0x8] sm:$0xff]
      %v680 = vld [vmem:[#allocation2 + $0x10] sm:$0xff]
      %v681 = vsel %vm390, 0, %v678
      %v682 = vsel %vm391, 0, %v679
      %v683 = vsel %vm392, 0, %v680
      %687 = vrot.lane.b32.xlu0 %v681, 1
      %v688 = vpop.permute.xlu0 %687
      %689 = vrot.lane.b32.xlu0 %v682, 1
      %v690 = vpop.permute.xlu0 %689
      %691 = vrot.lane.b32.xlu0 %v683, 1
      %v692 = vpop.permute.xlu0 %691
      %v693 = vsel %vm405, %v688, %v690
      %v694 = vsel %vm405, %v690, %v692
      %697 = vst [vmem:[#allocation3 + $0x30] sm:$0xff] %v693
      %698 = vst [vmem:[#allocation3 + $0x38] sm:$0xff] %v694
      %v699 = vld [vmem:[#allocation2 + $0x8] sm:$0xff]
      %v700 = vld [vmem:[#allocation2 + $0x10] sm:$0xff]
      %701 = vst [vmem:[#allocation3 + $0x40] sm:$0xff] %v699
      %702 = vst [vmem:[#allocation3 + $0x48] sm:$0xff] %v700
      %v703 = vld [vmem:[#allocation2 + $0x8] sm:$0xff]
      %v704 = vld [vmem:[#allocation2 + $0x10] sm:$0xff]
      %v705 = vld [vmem:[#allocation2 + $0x18] sm:$0xff]
      %v706 = vsel %vm424, 0, %v703
      %v707 = vsel %vm425, 0, %v704
      %v708 = vsel %vm426, 0, %v705
      %712 = vrot.lane.b32.xlu0 %v706, 127
      %v713 = vpop.permute.xlu0 %712
      %714 = vrot.lane.b32.xlu0 %v707, 127
      %v715 = vpop.permute.xlu0 %714
      %716 = vrot.lane.b32.xlu0 %v708, 127
      %v717 = vpop.permute.xlu0 %716
      %v718 = vsel %vm388, %v713, %v715
      %v719 = vsel %vm388, %v715, %v717
      %722 = vst [vmem:[#allocation3 + $0x50] sm:$0xff] %v718
      %723 = vst [vmem:[#allocation3 + $0x58] sm:$0xff] %v719
      %v724 = vld [vmem:[#allocation2 + $0x8] sm:$0xff]
      %v725 = vld [vmem:[#allocation2 + $0x10] sm:$0xff]
      %v726 = vld [vmem:[#allocation2 + $0x18] sm:$0xff]
      %v727 = vsel %vm453, 0, %v724
      %v728 = vsel %vm454, 0, %v725
      %v729 = vsel %vm455, 0, %v726
      %733 = vrot.lane.b32.xlu0 %v727, 113
      %v734 = vpop.permute.xlu0 %733
      %735 = vrot.lane.b32.xlu0 %v728, 113
      %v736 = vpop.permute.xlu0 %735
      %737 = vrot.lane.b32.xlu0 %v729, 113
      %v738 = vpop.permute.xlu0 %737
      %v739 = vsel %vm357, %v734, %v736
      %v740 = vsel %vm357, %v736, %v738
      %743 = vst [vmem:[#allocation3 + $0x60] sm:$0xff] %v739
      %744 = vst [vmem:[#allocation3 + $0x68] sm:$0xff] %v740
      %v745 = vld [vmem:[#allocation2 + $0x8] sm:$0xff]
      %v746 = vld [vmem:[#allocation2 + $0x10] sm:$0xff]
      %v747 = vld [vmem:[#allocation2 + $0x18] sm:$0xff]
      %751 = vrot.lane.b32.xlu0 %v745, 112
      %v752 = vpop.permute.xlu0 %751
      %753 = vrot.lane.b32.xlu0 %v746, 112
      %v754 = vpop.permute.xlu0 %753
      %755 = vrot.lane.b32.xlu0 %v747, 112
      %v756 = vpop.permute.xlu0 %755
      %v757 = vsel %vm486, %v752, %v754
      %v758 = vsel %vm486, %v754, %v756
      %761 = vst [vmem:[#allocation3 + $0x70] sm:$0xff] %v757
      %762 = vst [vmem:[#allocation3 + $0x78] sm:$0xff] %v758
      %v763 = vld [vmem:[#allocation2 + $0x8] sm:$0xff]
      %v764 = vld [vmem:[#allocation2 + $0x10] sm:$0xff]
      %v765 = vld [vmem:[#allocation2 + $0x18] sm:$0xff]
      %v766 = vsel %vm501, 0, %v763
      %v767 = vsel %vm502, 0, %v764
      %v768 = vsel %vm503, 0, %v765
      %772 = vrot.lane.b32.xlu0 %v766, 111
      %v773 = vpop.permute.xlu0 %772
      %774 = vrot.lane.b32.xlu0 %v767, 111
      %v775 = vpop.permute.xlu0 %774
      %776 = vrot.lane.b32.xlu0 %v768, 111
      %v777 = vpop.permute.xlu0 %776
      %v778 = vsel %vm293, %v773, %v775
      %v779 = vsel %vm293, %v775, %v777
      %782 = vst [vmem:[#allocation3 + $0x80] sm:$0xff] %v778
      %783 = vst [vmem:[#allocation3 + $0x88] sm:$0xff] %v779
      %v784 = vld [vmem:[%s3] sm:$0xff]
      %v785 = vld [vmem:[%s3 + $0x8] sm:$0xff]
      %v786 = vld [vmem:[#allocation3] sm:$0xff]
      %v787 = vld [vmem:[#allocation3 + $0x8] sm:$0xff]
      %v788 = vld [vmem:[#allocation3 + $0x10] sm:$0xff]
      %v789 = vld [vmem:[#allocation3 + $0x18] sm:$0xff]
      %v790 = vld [vmem:[#allocation3 + $0x20] sm:$0xff]
      %v791 = vld [vmem:[#allocation3 + $0x28] sm:$0xff]
      %v792 = vld [vmem:[#allocation3 + $0x30] sm:$0xff]
      %v793 = vld [vmem:[#allocation3 + $0x38] sm:$0xff]
      %v794 = vld [vmem:[#allocation3 + $0x40] sm:$0xff]
      %v795 = vld [vmem:[#allocation3 + $0x48] sm:$0xff]
      %v796 = vld [vmem:[#allocation3 + $0x50] sm:$0xff]
      %v797 = vld [vmem:[#allocation3 + $0x58] sm:$0xff]
      %v798 = vld [vmem:[#allocation3 + $0x60] sm:$0xff]
      %v799 = vld [vmem:[#allocation3 + $0x68] sm:$0xff]
      %v800 = vld [vmem:[#allocation3 + $0x70] sm:$0xff]
      %v801 = vld [vmem:[#allocation3 + $0x78] sm:$0xff]
      %v802 = vld [vmem:[#allocation3 + $0x80] sm:$0xff]
      %v803 = vld [vmem:[#allocation3 + $0x88] sm:$0xff]
      %805 = vset.pattern.permute.xlu0 0
      %806 = vperm.xlu0 %805, %v616
      %v807 = vpop.permute.xlu0 %806
      %810 = vset.pattern.permute.xlu0 0
      %811 = vperm.xlu0 %810, %v617
      %v812 = vpop.permute.xlu0 %811
      %v816 = vunpack.c.l.b16 %v784
      %v817 = vunpack.c.h.b16 %v784
      %v818 = vunpack.c.l.b16 %v785
      %v819 = vunpack.c.h.b16 %v785
      %v820 = vpack.c.b16 %v818, %v816
      %v821 = vpack.c.b16 %v819, %v817
      %v824 = vsel %vm561, %v821, 0
      %826 = vmatprep.subr.bf16.mxu0 %v787
      %827 = vmatpush1.bf16.msra.mxu0 %v786
      %828 = vmatprep.subr.bf16.mxu0 %v789
      %829 = vmatpush1.bf16.msra.mxu0 %v788
      %830 = vmatprep.subr.bf16.mxu0 %v791
      %831 = vmatpush1.bf16.msra.mxu0 %v790
      %832 = vmatprep.subr.bf16.mxu0 %v793
      %833 = vmatpush1.bf16.msra.mxu0 %v792
      %834 = vmatprep.subr.bf16.mxu0 %v795
      %835 = vmatpush1.bf16.msra.mxu0 %v794
      %836 = vmatprep.subr.bf16.mxu0 %v797
      %837 = vmatpush1.bf16.msra.mxu0 %v796
      %838 = vmatprep.subr.bf16.mxu0 %v799
      %839 = vmatpush1.bf16.msra.mxu0 %v798
      %840 = vmatprep.subr.bf16.mxu0 %v801
      %841 = vmatpush1.bf16.msra.mxu0 %v800
      %842 = vmatprep.subr.bf16.mxu0 %v803
      %843 = vmatpush1.bf16.msra.mxu0 %v802
      %844 = vmatprep.subr.bf16.mxu0 0
      %845 = vmatpush1.bf16.msra.mxu0 0
      %846 = vmatprep.subr.bf16.mxu0 0
      %847 = vmatpush1.bf16.msra.mxu0 0
      %848 = vmatprep.subr.bf16.mxu0 0
      %849 = vmatpush1.bf16.msra.mxu0 0
      %850 = vmatprep.subr.bf16.mxu0 0
      %851 = vmatpush1.bf16.msra.mxu0 0
      %852 = vmatprep.subr.bf16.mxu0 0
      %853 = vmatpush1.bf16.msra.mxu0 0
      %854 = vmatprep.subr.bf16.mxu0 0
      %855 = vmatpush1.bf16.msra.mxu0 0
      %856 = vmatprep.subr.bf16.mxu0 0
      %857 = vmatpush1.bf16.msra.mxu0 0
      %858 = vmatprep.mubr.bf16.mxu0 %v824
      %859 = vmatmul.mubr.bf16.gmra.mrb[0].mxu0 %v820
      %v860 = vpop.f32.mrb[0].mxu0
      %v861 = vadd.f32 %v807, %v860
      %v862 = vpop.f32.mrb[0].mxu0
      %v863 = vadd.f32 %v807, %v862
      %v864 = vpop.f32.mrb[0].mxu0
      %v865 = vadd.f32 %v812, %v864
      %v866 = vpop.f32.mrb[0].mxu0
      %v867 = vadd.f32 %v812, %v866
      %868 = vdwg.mxu0
      %v869 = vld [vmem:[%s219] sm:$0xff]
      %v870 = vld [vmem:[%s219 + $0x8] sm:$0xff]
      %v871 = vld [vmem:[%s219 + $0x10] sm:$0xff]
      %v872 = vld [vmem:[%s219 + $0x18] sm:$0xff]
      %v873 = vadd.f32 %v861, %v869
      %v874 = vadd.f32 %v863, %v870
      %v875 = vadd.f32 %v865, %v871
      %v876 = vadd.f32 %v867, %v872
      %v877 = vmax.f32 %v873, 0.0
      %v878 = vmax.f32 %v874, 0.0
      %v879 = vmax.f32 %v875, 0.0
      %v880 = vmax.f32 %v876, 0.0
      %881 = vst [vmem:[%s224] sm:$0xff] %v877
      %882 = vst [vmem:[%s224 + $0x8] sm:$0xff] %v878
      %883 = vst [vmem:[%s224 + $0x10] sm:$0xff] %v879
      %884 = vst [vmem:[%s224 + $0x18] sm:$0xff] %v880
      %p885 = scmp.lt.s32.totalorder %s16, 1
      %s886 = scalar_select %p885, %s16, 1
      %s887 = smul.addr %s886, 4
      %s888 = smul.addr %s887, 8
      %s889 = scalar_lea.vmem %s5, %s888
      // Predicated region
      $region41: #{basic_block_forward.1} parent=39 // pred_check
        %p890 = pneg %p144
      $region42: #{basic_block_forward.1} parent=39 // pred_check_branch
        %892 = sbr.rel (%p890) target = $region44
      $region43: #{basic_block_forward.1} parent=39 // pred_region
        _
      $region44: #{basic_block_forward.1} parent=39 // pred_fallthru
        _
    $region40: #{basic_block_forward.1} parent=5 // pred_fallthru
      _
    %p893 = scmp.le.s32.totalorder 2, %s11
    // Predicated region
    $region45: #{basic_block_forward.1} parent=5 // pred_check
      %p894 = pneg %p893
    $region46: #{basic_block_forward.1} parent=5 // pred_check_branch
      %896 = sbr.rel (%p894) target = $region48
    $region47: #{basic_block_forward.1} parent=5 // pred_region
      %s897 = ssub.s32 %s11, 2
      // Predicated region
      $region49: #{basic_block_forward.1} parent=47 // pred_check
        %p898 = pneg %p150
      $region50: #{basic_block_forward.1} parent=47 // pred_check_branch
        %900 = sbr.rel (%p898) target = $region52
      $region51: #{basic_block_forward.1} parent=47 // pred_region
        %p901 = scmp.lt.s32.totalorder %s17, 1
        %s902 = scalar_select %p901, %s17, 1
        %s903 = smul.addr %s902, 4
        %s904 = smul.addr %s903, 8
        %s905 = scalar_lea.vmem %s5, %s904
      $region52: #{basic_block_forward.1} parent=47 // pred_fallthru
        _
    $region48: #{basic_block_forward.1} parent=5 // pred_fallthru
      _
  $region6: #{basic_block_forward.1} parent=0 // loop_footer
    %s15 = sadd.s32 1, %s11
  $region7: #{basic_block_forward.1} parent=0 // loop_footer_branch
    %10 = sbr.rel target = $region3
  $region8: #{basic_block_forward.1} parent=0 // loop_exit
    _

</llo_original>
